<compile_context>
chip_gen: v5e
topology: v5e:2x2
jax: 0.10.0
libtpu: 0.0.40
codegen_flags: <defaults>
</compile_context>

<pallas_src>
import jax
import jax.numpy as jnp
from jax.experimental import pallas as pl
from jax.experimental.pallas import tpu as pltpu


def _round_up(x, m):
    return ((x + m - 1) // m) * m


def _cdiv(a, b):
    return (a + b - 1) // b


def _lora_linear_kernel(x_ref, w_ref, bias_ref, bt_ref, at_ref, o_ref):
    # x_ref   : (TM, K)  input dtype (f32) -- cast on the VPU, free under MXU
    # w_ref   : (K, TN)  compute dtype, pre-transposed frozen base weight
    # bias_ref: (1, TN)  f32
    # bt_ref  : (K, R)   f32, B^T (LoRA down-proj)
    # at_ref  : (R, TN)  f32, scale * A^T (LoRA up-proj)
    # o_ref   : (TM, TN) output dtype
    x = x_ref[...]
    xc = x.astype(w_ref.dtype)
    acc = jnp.dot(xc, w_ref[...], preferred_element_type=jnp.float32)
    # Fused rank-r LoRA epilogue: x @ B^T @ (scale * A^T).  Negligible MXU
    # time; avoids rebuilding/re-streaming an effective (OUT, IN) weight.
    t = jnp.dot(x.astype(jnp.float32), bt_ref[...],
                preferred_element_type=jnp.float32)
    acc = acc + jnp.dot(t, at_ref[...], preferred_element_type=jnp.float32)
    o_ref[...] = (acc + bias_ref[...]).astype(o_ref.dtype)


def pack_lora_base(w, b, *, compute_dtype=jnp.bfloat16):
    """One-time packing of the frozen nn.Linear base weight.

    w: (OUT, IN), b: (OUT,) ->  wt_pad: (IN, OUT_pad) compute_dtype,
    bias_pad: (1, OUT_pad) f32, with OUT padded to a multiple of 128 so
    output stores are lane-dense.  Call this ONCE outside the hot path
    (base weights are frozen in LoRA fine-tuning / inference).
    """
    out_f, _ = w.shape
    n_pad = _round_up(out_f, 128)
    wt = w.T.astype(compute_dtype)                               # (IN, OUT)
    bias = b.astype(jnp.float32).reshape(1, out_f)
    if n_pad != out_f:
        wt = jnp.pad(wt, ((0, 0), (0, n_pad - out_f)))
        bias = jnp.pad(bias, ((0, 0), (0, n_pad - out_f)))
    return wt, bias


def lora_linear(x, wt_pad, bias_pad, a, b_lora, *, alpha=1.0, rank=4,
                tile_m=512, max_tile_n=2048):
    """LoRALinear forward.  x: (..., IN) -> (..., OUT).

    wt_pad/bias_pad come from pack_lora_base (frozen base weight, packed once).
    a: (OUT, rank), b_lora: (rank, IN) are the live LoRA factors.
    """
    scale = alpha / rank
    in_features = x.shape[-1]
    out_features = a.shape[0]
    n_pad = wt_pad.shape[1]
    lead = x.shape[:-1]
    out_dtype = x.dtype

    x2d = x.reshape(-1, in_features)          # keep original dtype, cast in-kernel
    m = x2d.shape[0]

    # Tiny per-call packing of the LoRA factors (rank padded to one sublane row).
    r_pad = _round_up(rank, 8)
    bt = jnp.pad(b_lora.T.astype(jnp.float32),
                 ((0, 0), (0, r_pad - rank)))                     # (K, R)
    at = jnp.pad(jnp.float32(scale) * a.T.astype(jnp.float32),
                 ((0, r_pad - rank), (0, n_pad - out_features)))  # (R, N_pad)

    # --- tile selection: full-N weight tile (stream W exactly once) when OUT
    # fits, balanced M tiles so the last tile is not mostly padding.
    if n_pad <= max_tile_n:
        tn = n_pad
    else:
        tn = _round_up(_cdiv(n_pad, _cdiv(n_pad, max_tile_n)), 128)
    if m <= tile_m:
        tm = m
    else:
        tm = _round_up(_cdiv(m, _cdiv(m, tile_m)), 8)

    # v7x has 2 TensorCores sharing "parallel" grid axes: guarantee >= 2 grid
    # steps for non-trivial shapes so neither core sits idle.
    if _cdiv(n_pad, tn) * _cdiv(m, tm) == 1:
        if n_pad >= 256:
            tn = _round_up(_cdiv(n_pad, 2), 128)
        elif m >= 16:
            tm = _round_up(_cdiv(m, 2), 8)

    n_tiles = _cdiv(n_pad, tn)
    m_tiles = _cdiv(m, tm)
    # N axis OUTER: the (K, tn) weight block stays VMEM-resident while the
    # smaller x blocks stream across M.
    grid = (n_tiles, m_tiles)

    c_item = jnp.dtype(wt_pad.dtype).itemsize
    x_item = jnp.dtype(x2d.dtype).itemsize
    o_item = jnp.dtype(out_dtype).itemsize

    cost = pl.CostEstimate(
        flops=(2 * m * n_pad * in_features
               + 2 * m * r_pad * (in_features + n_pad)
               + 2 * m * n_pad),
        transcendentals=0,
        bytes_accessed=(n_tiles * m * in_features * x_item       # x, once per N tile
                        + in_features * n_pad * c_item           # W, streamed once
                        + (n_pad + in_features * r_pad + r_pad * n_pad) * 4
                        + m * n_pad * o_item),
    )

    # Explicit VMEM budget with headroom (double-buffered blocks); clamp to
    # v7x's 64 MiB physical VMEM.
    vmem_need = 2 * (tm * in_features * x_item
                     + in_features * tn * c_item
                     + tn * 4
                     + in_features * r_pad * 4
                     + r_pad * tn * 4
                     + tm * tn * o_item)
    vmem_limit = min(max(vmem_need + (4 << 20), 32 << 20), 64 << 20)

    out = pl.pallas_call(
        _lora_linear_kernel,
        out_shape=jax.ShapeDtypeStruct((m, n_pad), out_dtype),
        grid_spec=pltpu.PrefetchScalarGridSpec(
            num_scalar_prefetch=0,
            grid=grid,
            in_specs=[
                pl.BlockSpec((tm, in_features), lambda ni, mi: (mi, 0)),
                pl.BlockSpec((in_features, tn), lambda ni, mi: (0, ni)),
                pl.BlockSpec((1, tn), lambda ni, mi: (0, ni)),
                pl.BlockSpec((in_features, r_pad), lambda ni, mi: (0, 0)),
                pl.BlockSpec((r_pad, tn), lambda ni, mi: (0, ni)),
            ],
            out_specs=pl.BlockSpec((tm, tn), lambda ni, mi: (mi, ni)),
        ),
        compiler_params=pltpu.CompilerParams(
            dimension_semantics=("parallel", "parallel"),
            vmem_limit_bytes=vmem_limit),
        cost_estimate=cost,
    )(x2d, wt_pad, bias_pad, bt, at)

    if n_pad != out_features:
        out = out[:, :out_features]
    return out.reshape(*lead, out_features)


if __name__ == "__main__":
    key = jax.random.PRNGKey(0)
    rank, alpha = 4, 1.0

    def make_params(k, in_f, out_f):
        kx, kw, kb, ka, kbb = jax.random.split(k, 5)
        w = jax.random.normal(kw, (out_f, in_f), jnp.float32) * 0.1
        b = jax.random.normal(kb, (out_f,), jnp.float32) * 0.1
        a = jax.random.normal(ka, (out_f, rank), jnp.float32) * 0.01
        bl = jax.random.normal(kbb, (rank, in_f), jnp.float32) * 0.01
        return kx, w, b, a, bl

    def reference(x, w, b, a, bl):
        scale = alpha / rank
        return x @ w.T + b + x @ (scale * (a @ bl)).T

    k1, k2 = jax.random.split(key)

    # --- Test 1: ConformerBlockWithLoRA q_lora shape (d_model=256), f32 path.
    kx, w, b, a, bl = make_params(k1, 256, 256)
    x = jax.random.normal(kx, (2, 8, 256), jnp.float32)
    wt_pad, bias_pad = pack_lora_base(w, b, compute_dtype=jnp.float32)  # once
    y = lora_linear(x, wt_pad, bias_pad, a, bl, alpha=alpha, rank=rank)
    y = jax.block_until_ready(y)
    y_ref = reference(x, w, b, a, bl)
    assert y.shape == (2, 8, 256)
    assert jnp.allclose(y, y_ref, atol=5e-2, rtol=5e-2), \
        float(jnp.max(jnp.abs(y - y_ref)))

    # --- Test 2: CrossAttnFusionWithLoRA q_lora shape (embed=768), bf16 base
    #     weight with f32 accumulation; balanced 2-step M grid, full-N weight
    #     tile (weight streamed from HBM exactly once).
    kx, w, b, a, bl = make_params(k2, 768, 768)
    x = jax.random.normal(kx, (2, 300, 768), jnp.float32)
    wt_pad, bias_pad = pack_lora_base(w, b, compute_dtype=jnp.bfloat16)  # once
    y = lora_linear(x, wt_pad, bias_pad, a, bl, alpha=alpha, rank=rank)
    y = jax.block_until_ready(y)
    y_ref = reference(x, w, b, a, bl)
    assert y.shape == (2, 300, 768)
    assert jnp.allclose(y, y_ref, atol=2e-1, rtol=5e-2), \
        float(jnp.max(jnp.abs(y - y_ref)))

    print("KERNEL_OK")
</pallas_src>

<mosaic_0001>
module attributes {stable_mosaic.version = 11 : i64} {
  func.func @_lora_linear_kernel(%arg0: i32, %arg1: i32, %arg2: memref<16x256xf32, #tpu.memory_space<vmem>>, %arg3: memref<256x128xf32, #tpu.memory_space<vmem>>, %arg4: memref<1x128xf32, #tpu.memory_space<vmem>>, %arg5: memref<256x8xf32, #tpu.memory_space<vmem>>, %arg6: memref<8x128xf32, #tpu.memory_space<vmem>>, %arg7: memref<16x128xf32, #tpu.memory_space<vmem>>) attributes {dimension_semantics = [#tpu.dimension_semantics<parallel>, #tpu.dimension_semantics<parallel>], iteration_bounds = array<i64: 2, 1>, scalar_prefetch = 0 : i64, scratch_operands = 0 : i64, tpu.core_type = #tpu.core_type<tc>, window_params = [{transform_indices = @transform_0, window_bounds = array<i64: 16, 256>}, {transform_indices = @transform_1, window_bounds = array<i64: 256, 128>}, {transform_indices = @transform_2, window_bounds = array<i64: 1, 128>}, {pipeline_mode = #tpu.pipeline_mode<synchronous>, transform_indices = @transform_3, window_bounds = array<i64: 256, 8>}, {transform_indices = @transform_4, window_bounds = array<i64: 8, 128>}, {transform_indices = @transform_5, window_bounds = array<i64: 16, 128>}]} {
    %c0 = arith.constant 0 : index
    %c0_0 = arith.constant 0 : index
    %0 = vector.load %arg2[%c0, %c0_0] : memref<16x256xf32, #tpu.memory_space<vmem>>, vector<16x256xf32>
    %c0_1 = arith.constant 0 : index
    %c0_2 = arith.constant 0 : index
    %1 = vector.load %arg3[%c0_1, %c0_2] : memref<256x128xf32, #tpu.memory_space<vmem>>, vector<256x128xf32>
    %cst = arith.constant dense<0.000000e+00> : vector<16x128xf32>
    %2 = tpu.matmul %0, %1, %cst {dimension_numbers = #tpu.dot_dimension_numbers<[1], [0], [0], [1], [0, 0, 1, 1], [], []>} : vector<16x256xf32>, vector<256x128xf32>, vector<16x128xf32> -> vector<16x128xf32>
    %c0_3 = arith.constant 0 : index
    %c0_4 = arith.constant 0 : index
    %3 = vector.load %arg5[%c0_3, %c0_4] : memref<256x8xf32, #tpu.memory_space<vmem>>, vector<256x8xf32>
    %cst_5 = arith.constant dense<0.000000e+00> : vector<16x8xf32>
    %4 = tpu.matmul %0, %3, %cst_5 {dimension_numbers = #tpu.dot_dimension_numbers<[1], [0], [0], [1], [0, 0, 1, 1], [], []>} : vector<16x256xf32>, vector<256x8xf32>, vector<16x8xf32> -> vector<16x8xf32>
    %c0_6 = arith.constant 0 : index
    %c0_7 = arith.constant 0 : index
    %5 = vector.load %arg6[%c0_6, %c0_7] : memref<8x128xf32, #tpu.memory_space<vmem>>, vector<8x128xf32>
    %cst_8 = arith.constant dense<0.000000e+00> : vector<16x128xf32>
    %6 = tpu.matmul %4, %5, %cst_8 {dimension_numbers = #tpu.dot_dimension_numbers<[1], [0], [0], [1], [0, 0, 1, 1], [], []>} : vector<16x8xf32>, vector<8x128xf32>, vector<16x128xf32> -> vector<16x128xf32>
    %7 = arith.addf %2, %6 : vector<16x128xf32>
    %c0_9 = arith.constant 0 : index
    %c0_10 = arith.constant 0 : index
    %8 = vector.load %arg4[%c0_9, %c0_10] : memref<1x128xf32, #tpu.memory_space<vmem>>, vector<1x128xf32>
    %9 = vector.broadcast %8 : vector<1x128xf32> to vector<16x128xf32>
    %10 = arith.addf %7, %9 : vector<16x128xf32>
    %c0_11 = arith.constant 0 : index
    %c0_12 = arith.constant 0 : index
    %11 = vector.load %arg7[%c0_11, %c0_12] : memref<16x128xf32, #tpu.memory_space<vmem>>, vector<16x128xf32>
    tpu.vector_store %arg7[%c0_11, %c0_12], %10 {strides = array<i32>} : memref<16x128xf32, #tpu.memory_space<vmem>>, vector<16x128xf32>,
    return
  }
  func.func @transform_0(%arg0: i32, %arg1: i32) -> (i32, i32) {
    %c0_i32 = arith.constant 0 : i32
    %c0_i32_0 = arith.constant 0 : i32
    return %arg1, %c0_i32 : i32, i32
  }
  func.func @transform_1(%arg0: i32, %arg1: i32) -> (i32, i32) {
    %c0_i32 = arith.constant 0 : i32
    %c0_i32_0 = arith.constant 0 : i32
    return %c0_i32, %arg0 : i32, i32
  }
  func.func @transform_2(%arg0: i32, %arg1: i32) -> (i32, i32) {
    %c0_i32 = arith.constant 0 : i32
    %c0_i32_0 = arith.constant 0 : i32
    return %c0_i32, %arg0 : i32, i32
  }
  func.func @transform_3(%arg0: i32, %arg1: i32) -> (i32, i32) {
    %c0_i32 = arith.constant 0 : i32
    %c0_i32_0 = arith.constant 0 : i32
    %c0_i32_1 = arith.constant 0 : i32
    return %c0_i32, %c0_i32_0 : i32, i32
  }
  func.func @transform_4(%arg0: i32, %arg1: i32) -> (i32, i32) {
    %c0_i32 = arith.constant 0 : i32
    %c0_i32_0 = arith.constant 0 : i32
    return %c0_i32, %arg0 : i32, i32
  }
  func.func @transform_5(%arg0: i32, %arg1: i32) -> (i32, i32) {
    %c0_i32 = arith.constant 0 : i32
    return %arg1, %arg0 : i32, i32
  }
}

</mosaic_0001>

<llo_original>
// kernel: tpu_custom_call.1
$region0: #{tpu_custom_call.1}
  #allocation0 [shape = 'u32[]', space=smem, size = 0x4, offset = 0x4, fixed_abs, tag = 'smem constant byte address 0x4 - core index']
  #allocation1 [shape = 'u32[72,128]{1,0:T(1,128)}', space=vmem, size = 0x9000, scoped, tag = 'internal scratch']
  %s0 = inlined_call_operand.vmem [shape: f32[16,256], index: 0, kind: input, shape index: {}]
  %s1 = inlined_call_operand.hbm [shape: f32[256,256], index: 1, kind: input, shape index: {}]
  %s2 = inlined_call_operand.vmem [shape: f32[1,256], index: 2, kind: input, shape index: {}]
  %s3 = inlined_call_operand.vmem [shape: f32[256,8], index: 3, kind: input, shape index: {}]
  %s4 = inlined_call_operand.vmem [shape: f32[8,256], index: 4, kind: input, shape index: {}]
  %s5 = inlined_call_operand.hbm [shape: f32[16,256], index: 5, kind: output, shape index: {}]
  %s6 = sld [smem:[#allocation0]]
  $region57: #{tpu_custom_call.1} parent=0
    _
  %s8 = ssub.s32 1, %s6
  %s9 = scalar_select 0, %s8, %s6
  $region1: #{tpu_custom_call.1} parent=0
    #allocation2 [shape = 'u8[262144]{0}', space=vmem, size = 0x40000, scoped, tag = 'input window, operand 1']
    #allocation3 [shape = 's32[2]{0}', space=sflag, size = 0x8, scoped, tag = 'scoped memory for tpu_custom_call.1']
    #allocation4 [shape = 's32[2]{0}', space=sflag, size = 0x8, scoped, tag = 'scoped memory for tpu_custom_call.1']
    #allocation5 [shape = 'u8[16384]{0}', space=vmem, size = 0x4000, scoped, tag = 'output window, operand 0']
    %10 = vsyncpa [#allocation3], 0
    %s11 = scalar_lea.sflag [#allocation3], 1
    %12 = vsyncpa %s11, 0
    %13 = vsyncpa [#allocation4], 0
    %s14 = scalar_lea.sflag [#allocation4], 1
    %15 = vsyncpa %s14, 0
    loop: start=0, step=1, limit=4
    $region2: #{tpu_custom_call.1} parent=1 // loop_pre_header
      _
    $region3: #{tpu_custom_call.1} parent=1 // loop_header
      %s17 = sphi 0, %s21
      %p18 = scmp.ge.s32.totalorder %s17, 4
      %s24 = sphi 0, %s36
      %s25 = sphi 0, %s32
      %s26 = sphi 0, %s24
      %s27 = sphi 0, %s25
      %s28 = sphi 0, %s26
      %s29 = sphi 0, %s27
      %s39 = sphi 0, %s41
      %s42 = sphi 0, %s39
      %s43 = sphi 0, %s42
      %s59 = sphi 0, %s43
      %s65 = sphi 0, %s67
      %s68 = sphi 0, %s65
      %s69 = sphi 0, %s68
      %s85 = sphi 0, %s69
      %s91 = sphi 0, %s93
      %s94 = sphi 0, %s91
      %s95 = sphi 0, %s94
      %s111 = sphi 0, %s95
      %s115 = sphi 0, %s115
      %s117 = sphi 0, %s115
      %s118 = sphi 0, %s117
      %s132 = sphi 0, %s118
      %s138 = sphi 0, %s140
      %s141 = sphi 0, %s138
      %s142 = sphi 0, %s141
      %s158 = sphi 0, %s142
      %s166 = sphi 0, %s168
      %s169 = sphi 0, %s166
      %s170 = sphi 0, %s169
      %s186 = sphi 0, %s170
    $region4: #{tpu_custom_call.1} parent=1 // loop_header_branch
      %20 = sbr.rel (%p18) target = $region8
    $region5: #{tpu_custom_call.1} parent=1 // loop_body
      %s22 = ssub.s32 %s17, 1
      %s23 = ssub.s32 %s17, 2
      %s30 = sadd.s32 1, %s25
      %p31 = scmp.ge.s32.totalorder %s30, 1
      %s32 = scalar_select %p31, 0, %s30
      %s33 = sadd.s32 1, %s24
      %s34 = scalar_select %p31, %s33, %s24
      %p35 = scmp.ge.s32.totalorder %s34, 2
      %s36 = scalar_select %p35, 0, %s34
      %s37 = ssub.s32 %s25, %s32
      %p38 = scmp.eq.s32.totalorder %s37, 0
      %s40 = sadd.s32 %s39, 1
      %s41 = scalar_select %p38, %s39, %s40
      %p44 = pneg %p38
      %p45 = scmp.eq.s32.totalorder %s17, 1
      %p46 = por %p44, %p45
      %p47 = scmp.ne.s32.totalorder %s39, %s42
      %p48 = scmp.eq.s32.totalorder %s17, 0
      %p49 = por %p47, %p48
      %p50 = scmp.ne.s32.totalorder %s39, %s42
      %p51 = scmp.eq.s32.totalorder %s22, 1
      %p52 = por %p50, %p51
      %p53 = scmp.ne.s32.totalorder %s42, %s43
      %p54 = scmp.eq.s32.totalorder %s22, 0
      %p55 = por %p53, %p54
      %p56 = scmp.ne.s32.totalorder %s42, %s43
      %p57 = scmp.eq.s32.totalorder %s23, 1
      %p58 = por %p56, %p57
      %p60 = scmp.ne.s32.totalorder %s43, %s59
      %p61 = scmp.eq.s32.totalorder %s23, 0
      %p62 = por %p60, %p61
      %s63 = ssub.s32 %s24, %s36
      %p64 = scmp.eq.s32.totalorder %s63, 0
      %s66 = sadd.s32 %s65, 1
      %s67 = scalar_select %p64, %s65, %s66
      %p70 = pneg %p64
      %p71 = scmp.eq.s32.totalorder %s17, 1
      %p72 = por %p70, %p71
      %p73 = scmp.ne.s32.totalorder %s65, %s68
      %p74 = scmp.eq.s32.totalorder %s17, 0
      %p75 = por %p73, %p74
      %p76 = scmp.ne.s32.totalorder %s65, %s68
      %p77 = scmp.eq.s32.totalorder %s22, 1
      %p78 = por %p76, %p77
      %p79 = scmp.ne.s32.totalorder %s68, %s69
      %p80 = scmp.eq.s32.totalorder %s22, 0
      %p81 = por %p79, %p80
      %p82 = scmp.ne.s32.totalorder %s68, %s69
      %p83 = scmp.eq.s32.totalorder %s23, 1
      %p84 = por %p82, %p83
      %p86 = scmp.ne.s32.totalorder %s69, %s85
      %p87 = scmp.eq.s32.totalorder %s23, 0
      %p88 = por %p86, %p87
      %s89 = ssub.s32 %s24, %s36
      %p90 = scmp.eq.s32.totalorder %s89, 0
      %s92 = sadd.s32 %s91, 1
      %s93 = scalar_select %p90, %s91, %s92
      %p96 = pneg %p90
      %p97 = scmp.eq.s32.totalorder %s17, 1
      %p98 = por %p96, %p97
      %p99 = scmp.ne.s32.totalorder %s91, %s94
      %p100 = scmp.eq.s32.totalorder %s17, 0
      %p101 = por %p99, %p100
      %p102 = scmp.ne.s32.totalorder %s91, %s94
      %p103 = scmp.eq.s32.totalorder %s22, 1
      %p104 = por %p102, %p103
      %p105 = scmp.ne.s32.totalorder %s94, %s95
      %p106 = scmp.eq.s32.totalorder %s22, 0
      %p107 = por %p105, %p106
      %p108 = scmp.ne.s32.totalorder %s94, %s95
      %p109 = scmp.eq.s32.totalorder %s23, 1
      %p110 = por %p108, %p109
      %p112 = scmp.ne.s32.totalorder %s95, %s111
      %p113 = scmp.eq.s32.totalorder %s23, 0
      %p114 = por %p112, %p113
      %s116 = sadd.s32 %s115, 1
      %p119 = scmp.eq.s32.totalorder %s17, 1
      %p120 = scmp.ne.s32.totalorder %s115, %s117
      %p121 = scmp.eq.s32.totalorder %s17, 0
      %p122 = por %p120, %p121
      %p123 = scmp.ne.s32.totalorder %s115, %s117
      %p124 = scmp.eq.s32.totalorder %s22, 1
      %p125 = por %p123, %p124
      %p126 = scmp.ne.s32.totalorder %s117, %s118
      %p127 = scmp.eq.s32.totalorder %s22, 0
      %p128 = por %p126, %p127
      %p129 = scmp.ne.s32.totalorder %s117, %s118
      %p130 = scmp.eq.s32.totalorder %s23, 1
      %p131 = por %p129, %p130
      %p133 = scmp.ne.s32.totalorder %s118, %s132
      %p134 = scmp.eq.s32.totalorder %s23, 0
      %p135 = por %p133, %p134
      %s136 = ssub.s32 %s24, %s36
      %p137 = scmp.eq.s32.totalorder %s136, 0
      %s139 = sadd.s32 %s138, 1
      %s140 = scalar_select %p137, %s138, %s139
      %p143 = pneg %p137
      %p144 = scmp.eq.s32.totalorder %s17, 1
      %p145 = por %p143, %p144
      %p146 = scmp.ne.s32.totalorder %s138, %s141
      %p147 = scmp.eq.s32.totalorder %s17, 0
      %p148 = por %p146, %p147
      %p149 = scmp.ne.s32.totalorder %s138, %s141
      %p150 = scmp.eq.s32.totalorder %s22, 1
      %p151 = por %p149, %p150
      %p152 = scmp.ne.s32.totalorder %s141, %s142
      %p153 = scmp.eq.s32.totalorder %s22, 0
      %p154 = por %p152, %p153
      %p155 = scmp.ne.s32.totalorder %s141, %s142
      %p156 = scmp.eq.s32.totalorder %s23, 1
      %p157 = por %p155, %p156
      %p159 = scmp.ne.s32.totalorder %s142, %s158
      %p160 = scmp.eq.s32.totalorder %s23, 0
      %p161 = por %p159, %p160
      %s162 = ssub.s32 %s25, %s32
      %s163 = ssub.s32 %s24, %s36
      %s164 = sor.u32 %s162, %s163
      %p165 = scmp.eq.s32.totalorder %s164, 0
      %s167 = sadd.s32 %s166, 1
      %s168 = scalar_select %p165, %s166, %s167
      %p171 = pneg %p165
      %p172 = scmp.eq.s32.totalorder %s17, 1
      %p173 = por %p171, %p172
      %p174 = scmp.ne.s32.totalorder %s166, %s169
      %p175 = scmp.eq.s32.totalorder %s17, 0
      %p176 = por %p174, %p175
      %p177 = scmp.ne.s32.totalorder %s166, %s169
      %p178 = scmp.eq.s32.totalorder %s22, 1
      %p179 = por %p177, %p178
      %p180 = scmp.ne.s32.totalorder %s169, %s170
      %p181 = scmp.eq.s32.totalorder %s22, 0
      %p182 = por %p180, %p181
      %p183 = scmp.ne.s32.totalorder %s169, %s170
      %p184 = scmp.eq.s32.totalorder %s23, 1
      %p185 = por %p183, %p184
      %p187 = scmp.ne.s32.totalorder %s170, %s186
      %p188 = scmp.eq.s32.totalorder %s23, 0
      %p189 = por %p187, %p188
      %p190 = scmp.le.s32.totalorder 1, %s17
      %p191 = scmp.lt.s32.totalorder %s17, 3
      %p192 = pnand %p190, %p191
      %p193 = pneg %p192
      // Predicated region
      $region9: #{tpu_custom_call.1} parent=5 // pred_check
        _
      $region10: #{tpu_custom_call.1} parent=5 // pred_check_branch
        %195 = sbr.rel (%p192) target = $region12
      $region11: #{tpu_custom_call.1} parent=5 // pred_region
        %s196 = ssub.s32 %s17, 1
        // Predicated region
        $region13: #{tpu_custom_call.1} parent=11 // pred_check
          %p197 = pneg %p55
        $region14: #{tpu_custom_call.1} parent=11 // pred_check_branch
          %199 = sbr.rel (%p197) target = $region16
        $region15: #{tpu_custom_call.1} parent=11 // pred_region
          %s200 = smul.u32 2, %s27
          %p201 = scmp.lt.s32.totalorder %s200, 1
          %s202 = scalar_select %p201, %s200, 1
          %s203 = smul.addr %s202, 2
          %s204 = smul.addr %s203, 8
          %s205 = scalar_lea.vmem %s0, %s204
          %s206 = smul.u32 2, %s27
        $region16: #{tpu_custom_call.1} parent=11 // pred_fallthru
          _
        // Predicated region
        $region17: #{tpu_custom_call.1} parent=11 // pred_check
          %p207 = pneg %p128
        $region18: #{tpu_custom_call.1} parent=11 // pred_check_branch
          %209 = sbr.rel (%p207) target = $region20
        $region19: #{tpu_custom_call.1} parent=11 // pred_region
          _
        $region20: #{tpu_custom_call.1} parent=11 // pred_fallthru
          _
      $region12: #{tpu_custom_call.1} parent=5 // pred_fallthru
        _
      %p210 = scmp.lt.s32.totalorder %s17, 2
      // Predicated region
      $region21: #{tpu_custom_call.1} parent=5 // pred_check
        %p211 = pneg %p210
      $region22: #{tpu_custom_call.1} parent=5 // pred_check_branch
        %213 = sbr.rel (%p211) target = $region24
      $region23: #{tpu_custom_call.1} parent=5 // pred_region
        // Predicated region
        $region25: #{tpu_custom_call.1} parent=23 // pred_check
          %p214 = pneg %p75
        $region26: #{tpu_custom_call.1} parent=23 // pred_check_branch
          %216 = sbr.rel (%p214) target = $region28
        $region27: #{tpu_custom_call.1} parent=23 // pred_region
          %s217 = sand.u32 %s65, 1
          %s218 = scalar_lea.sflag [#allocation3], %s217
          %s219 = sand.u32 %s65, 1
          %s220 = smul.addr %s219, 256
          %s221 = scalar_lea.vmem [#allocation2], %s220
          %223 = vsyncadd %s218, 0
          %s224 = smul.addr %s24, 8
          %s225 = scalar_lea.hbm %s1, %s224
          %s226 = sshll.u32 %s225, 4
          %s227 = int_to_ptr.hbm [resolvable:$true] %s226
          %s228 = sshll.u32 %s221, 4
          %s229 = int_to_ptr.vmem [resolvable:$true] %s228
          %234 = dma.hbm_to_vmem [thread:$0]  %s227, 4096, %s229, %s218, 256, 128, 8
        $region28: #{tpu_custom_call.1} parent=23 // pred_fallthru
          _
        // Predicated region
        $region29: #{tpu_custom_call.1} parent=23 // pred_check
          %p235 = pneg %p101
        $region30: #{tpu_custom_call.1} parent=23 // pred_check_branch
          %237 = sbr.rel (%p235) target = $region32
        $region31: #{tpu_custom_call.1} parent=23 // pred_region
          %p238 = scmp.lt.s32.totalorder %s24, 1
          %s239 = scalar_select %p238, %s24, 1
          %s240 = scalar_lea.vmem %s2, %s239
        $region32: #{tpu_custom_call.1} parent=23 // pred_fallthru
          _
        // Predicated region
        $region33: #{tpu_custom_call.1} parent=23 // pred_check
          %p241 = pneg %p148
        $region34: #{tpu_custom_call.1} parent=23 // pred_check_branch
          %243 = sbr.rel (%p241) target = $region36
        $region35: #{tpu_custom_call.1} parent=23 // pred_region
          %p244 = scmp.lt.s32.totalorder %s24, 1
          %s245 = scalar_select %p244, %s24, 1
          %s246 = smul.addr %s245, 8
          %s247 = scalar_lea.vmem %s4, %s246
        $region36: #{tpu_custom_call.1} parent=23 // pred_fallthru
          _
      $region24: #{tpu_custom_call.1} parent=5 // pred_fallthru
        _
      %p248 = scmp.le.s32.totalorder 1, %s17
      %p249 = scmp.lt.s32.totalorder %s17, 3
      %p250 = pnand %p248, %p249
      %p251 = pneg %p250
      // Predicated region
      $region37: #{tpu_custom_call.1} parent=5 // pred_check
        _
      $region38: #{tpu_custom_call.1} parent=5 // pred_check_branch
        %253 = sbr.rel (%p250) target = $region40
      $region39: #{tpu_custom_call.1} parent=5 // pred_region
        %s254 = ssub.s32 %s17, 1
        %s255 = sand.u32 %s68, 1
        %s256 = scalar_lea.sflag [#allocation3], %s255
        %s257 = sand.u32 %s68, 1
        %s258 = smul.addr %s257, 256
        %s259 = scalar_lea.vmem [#allocation2], %s258
        // Predicated region
        $region41: #{tpu_custom_call.1} parent=39 // pred_check
          %p260 = pneg %p81
        $region42: #{tpu_custom_call.1} parent=39 // pred_check_branch
          %262 = sbr.rel (%p260) target = $region44
        $region43: #{tpu_custom_call.1} parent=39 // pred_region
          %264 = dma.done %s256, 4096
        $region44: #{tpu_custom_call.1} parent=39 // pred_fallthru
          _
        %s265 = smul.u32 2, %s27
        %p266 = scmp.lt.s32.totalorder %s265, 1
        %s267 = scalar_select %p266, %s265, 1
        %s268 = smul.addr %s267, 2
        %s269 = smul.addr %s268, 8
        %s270 = scalar_lea.vmem %s0, %s269
        %p271 = pneg %p55
        %p272 = pneg %p52
        %s273 = sand.u32 %s68, 1
        %s274 = scalar_lea.sflag [#allocation3], %s273
        %s275 = sand.u32 %s68, 1
        %s276 = smul.addr %s275, 256
        %s277 = scalar_lea.vmem [#allocation2], %s276
        %p278 = pneg %p81
        %p279 = pneg %p78
        %p280 = scmp.lt.s32.totalorder %s26, 1
        %s281 = scalar_select %p280, %s26, 1
        %s282 = scalar_lea.vmem %s2, %s281
        %p283 = pneg %p107
        %p284 = pneg %p104
        %p285 = pneg %p128
        %p286 = pneg %p125
        %p287 = scmp.lt.s32.totalorder %s26, 1
        %s288 = scalar_select %p287, %s26, 1
        %s289 = smul.addr %s288, 8
        %s290 = scalar_lea.vmem %s4, %s289
        %p291 = pneg %p154
        %p292 = pneg %p151
        %p293 = pneg %p182
        %p294 = pneg %p179
        %s295 = sand.u32 %s169, 1
        %s296 = scalar_lea.sflag [#allocation4], %s295
        %s297 = sand.u32 %s169, 1
        %s298 = smul.addr %s297, 16
        %s299 = scalar_lea.vmem [#allocation5], %s298
        %s300 = smul.u32 2, %s27
        %p301 = scmp.lt.s32.totalorder %s300, 1
        %s302 = scalar_select %p301, %s300, 1
        %s303 = smul.addr %s302, 2
        %s304 = smul.addr %s303, 8
        %s305 = scalar_lea.vmem %s0, %s304
        %s306 = smul.u32 2, %s27
        %p307 = scmp.lt.s32.totalorder %s26, 1
        %s308 = scalar_select %p307, %s26, 1
        %s309 = scalar_lea.vmem %s2, %s308
        %p310 = scmp.lt.s32.totalorder %s26, 1
        %s311 = scalar_select %p310, %s26, 1
        %s312 = smul.addr %s311, 8
        %s313 = scalar_lea.vmem %s4, %s312
        %s314 = smul.u32 2, %s27
        %v315 = vld [vmem:[%s305] sm:$0xff]
        %v316 = vld [vmem:[%s305 + $0x8] sm:$0xff]
        %v317 = vld [vmem:[%s305 + $0x10] sm:$0xff]
        %v318 = vld [vmem:[%s305 + $0x18] sm:$0xff]
        %v319 = vld [vmem:[%s259] sm:$0xff]
        %v320 = vld [vmem:[%s259 + $0x8] sm:$0xff]
        %v321 = vld [vmem:[%s259 + $0x10] sm:$0xff]
        %v322 = vld [vmem:[%s259 + $0x18] sm:$0xff]
        %v323 = vld [vmem:[%s259 + $0x20] sm:$0xff]
        %v324 = vld [vmem:[%s259 + $0x28] sm:$0xff]
        %v325 = vld [vmem:[%s259 + $0x30] sm:$0xff]
        %v326 = vld [vmem:[%s259 + $0x38] sm:$0xff]
        %v327 = vld [vmem:[%s259 + $0x40] sm:$0xff]
        %v328 = vld [vmem:[%s259 + $0x48] sm:$0xff]
        %v329 = vld [vmem:[%s259 + $0x50] sm:$0xff]
        %v330 = vld [vmem:[%s259 + $0x58] sm:$0xff]
        %v331 = vld [vmem:[%s259 + $0x60] sm:$0xff]
        %v332 = vld [vmem:[%s259 + $0x68] sm:$0xff]
        %v333 = vld [vmem:[%s259 + $0x70] sm:$0xff]
        %v334 = vld [vmem:[%s259 + $0x78] sm:$0xff]
        %v335 = vld [vmem:[%s259 + $0x80] sm:$0xff]
        %v336 = vld [vmem:[%s259 + $0x88] sm:$0xff]
        %v337 = vld [vmem:[%s259 + $0x90] sm:$0xff]
        %v338 = vld [vmem:[%s259 + $0x98] sm:$0xff]
        %v339 = vld [vmem:[%s259 + $0xa0] sm:$0xff]
        %v340 = vld [vmem:[%s259 + $0xa8] sm:$0xff]
        %v341 = vld [vmem:[%s259 + $0xb0] sm:$0xff]
        %v342 = vld [vmem:[%s259 + $0xb8] sm:$0xff]
        %v343 = vld [vmem:[%s259 + $0xc0] sm:$0xff]
        %v344 = vld [vmem:[%s259 + $0xc8] sm:$0xff]
        %v345 = vld [vmem:[%s259 + $0xd0] sm:$0xff]
        %v346 = vld [vmem:[%s259 + $0xd8] sm:$0xff]
        %v347 = vld [vmem:[%s259 + $0xe0] sm:$0xff]
        %v348 = vld [vmem:[%s259 + $0xe8] sm:$0xff]
        %v349 = vld [vmem:[%s259 + $0xf0] sm:$0xff]
        %v350 = vld [vmem:[%s259 + $0xf8] sm:$0xff]
        %v351 = vld [vmem:[%s3] sm:$0xff]
        %v352 = vld [vmem:[%s3 + $0x8] sm:$0xff]
        %v353 = vld [vmem:[%s3 + $0x10] sm:$0xff]
        %v354 = vld [vmem:[%s3 + $0x18] sm:$0xff]
        %v355 = vld [vmem:[%s3 + $0x20] sm:$0xff]
        %v356 = vld [vmem:[%s3 + $0x28] sm:$0xff]
        %v357 = vld [vmem:[%s3 + $0x30] sm:$0xff]
        %v358 = vld [vmem:[%s3 + $0x38] sm:$0xff]
        %v359 = vld [vmem:[%s3 + $0x40] sm:$0xff]
        %v360 = vld [vmem:[%s3 + $0x48] sm:$0xff]
        %v361 = vld [vmem:[%s3 + $0x50] sm:$0xff]
        %v362 = vld [vmem:[%s3 + $0x58] sm:$0xff]
        %v363 = vld [vmem:[%s3 + $0x60] sm:$0xff]
        %v364 = vld [vmem:[%s3 + $0x68] sm:$0xff]
        %v365 = vld [vmem:[%s3 + $0x70] sm:$0xff]
        %v366 = vld [vmem:[%s3 + $0x78] sm:$0xff]
        %v367 = vld [vmem:[%s3 + $0x80] sm:$0xff]
        %v368 = vld [vmem:[%s3 + $0x88] sm:$0xff]
        %v369 = vld [vmem:[%s3 + $0x90] sm:$0xff]
        %v370 = vld [vmem:[%s3 + $0x98] sm:$0xff]
        %v371 = vld [vmem:[%s3 + $0xa0] sm:$0xff]
        %v372 = vld [vmem:[%s3 + $0xa8] sm:$0xff]
        %v373 = vld [vmem:[%s3 + $0xb0] sm:$0xff]
        %v374 = vld [vmem:[%s3 + $0xb8] sm:$0xff]
        %v375 = vld [vmem:[%s3 + $0xc0] sm:$0xff]
        %v376 = vld [vmem:[%s3 + $0xc8] sm:$0xff]
        %v377 = vld [vmem:[%s3 + $0xd0] sm:$0xff]
        %v378 = vld [vmem:[%s3 + $0xd8] sm:$0xff]
        %v379 = vld [vmem:[%s3 + $0xe0] sm:$0xff]
        %v380 = vld [vmem:[%s3 + $0xe8] sm:$0xff]
        %v381 = vld [vmem:[%s3 + $0xf0] sm:$0xff]
        %v382 = vld [vmem:[%s3 + $0xf8] sm:$0xff]
        %383 = vmatpush.msra.mxu0 %v366
        %384 = vmatpush.msra.mxu0 %v365
        %385 = vmatpush.msra.mxu0 %v364
        %386 = vmatpush.msra.mxu0 %v363
        %387 = vmatpush.msra.mxu0 %v362
        %388 = vmatpush.msra.mxu0 %v361
        %389 = vmatpush.msra.mxu0 %v360
        %390 = vmatpush.msra.mxu0 %v359
        %391 = vmatpush.msra.mxu0 %v358
        %392 = vmatpush.msra.mxu0 %v357
        %393 = vmatpush.msra.mxu0 %v356
        %394 = vmatpush.msra.mxu0 %v355
        %395 = vmatpush.msra.mxu0 %v354
        %396 = vmatpush.msra.mxu0 %v353
        %397 = vmatpush.msra.mxu0 %v352
        %398 = vmatpush.msra.mxu0 %v351
        %399 = vmatmul.f32.gmra.mxu0 %v315
        %v400 = vpop.f32.mrf.mxu0
        %v401 = vadd.f32 0.0, %v400
        %402 = vmatmul.f32.gmra.mxu0 %v317
        %v403 = vpop.f32.mrf.mxu0
        %v404 = vadd.f32 0.0, %v403
        %405 = vdwg.mxu0
        %406 = vmatpush.msra.mxu0 %v382
        %407 = vmatpush.msra.mxu0 %v381
        %408 = vmatpush.msra.mxu0 %v380
        %409 = vmatpush.msra.mxu0 %v379
        %410 = vmatpush.msra.mxu0 %v378
        %411 = vmatpush.msra.mxu0 %v377
        %412 = vmatpush.msra.mxu0 %v376
        %413 = vmatpush.msra.mxu0 %v375
        %414 = vmatpush.msra.mxu0 %v374
        %415 = vmatpush.msra.mxu0 %v373
        %416 = vmatpush.msra.mxu0 %v372
        %417 = vmatpush.msra.mxu0 %v371
        %418 = vmatpush.msra.mxu0 %v370
        %419 = vmatpush.msra.mxu0 %v369
        %420 = vmatpush.msra.mxu0 %v368
        %421 = vmatpush.msra.mxu0 %v367
        %422 = vmatmul.f32.gmra.mxu0 %v316
        %v423 = vpop.f32.mrf.mxu0
        %v424 = vadd.f32 %v401, %v423
        %425 = vmatmul.f32.gmra.mxu0 %v318
        %v426 = vpop.f32.mrf.mxu0
        %v427 = vadd.f32 %v404, %v426
        %428 = vdwg.mxu0
        %v429 = vld [vmem:[%s313] sm:$0xff]
        %vm430 = vcmask 64512
        %v432 = vsel %vm430, %v424, 0
        %v435 = vsel %vm430, %v427, 0
        %437 = vmatpush.msra.mxu0 0.0
        %438 = vmatpush.msra.mxu0 0.0
        %439 = vmatpush.msra.mxu0 0.0
        %440 = vmatpush.msra.mxu0 0.0
        %441 = vmatpush.msra.mxu0 0.0
        %442 = vmatpush.msra.mxu0 0.0
        %443 = vmatpush.msra.mxu0 0.0
        %444 = vmatpush.msra.mxu0 0.0
        %445 = vmatpush.msra.mxu0 0.0
        %446 = vmatpush.msra.mxu0 0.0
        %447 = vmatpush.msra.mxu0 0.0
        %448 = vmatpush.msra.mxu0 0.0
        %449 = vmatpush.msra.mxu0 0.0
        %450 = vmatpush.msra.mxu0 0.0
        %451 = vmatpush.msra.mxu0 0.0
        %452 = vmatpush.msra.mxu0 %v429
        %453 = vmatmul.f32.gmra.mxu0 %v432
        %v454 = vpop.f32.mrf.mxu0
        %v455 = vadd.f32 0.0, %v454
        %456 = vmatmul.f32.gmra.mxu0 %v435
        %v457 = vpop.f32.mrf.mxu0
        %v458 = vadd.f32 0.0, %v457
        %459 = vdwg.mxu0
        %460 = vmatpush.msra.mxu0 %v334
        %461 = vmatpush.msra.mxu0 %v333
        %462 = vmatpush.msra.mxu0 %v332
        %463 = vmatpush.msra.mxu0 %v331
        %464 = vmatpush.msra.mxu0 %v330
        %465 = vmatpush.msra.mxu0 %v329
        %466 = vmatpush.msra.mxu0 %v328
        %467 = vmatpush.msra.mxu0 %v327
        %468 = vmatpush.msra.mxu0 %v326
        %469 = vmatpush.msra.mxu0 %v325
        %470 = vmatpush.msra.mxu0 %v324
        %471 = vmatpush.msra.mxu0 %v323
        %472 = vmatpush.msra.mxu0 %v322
        %473 = vmatpush.msra.mxu0 %v321
        %474 = vmatpush.msra.mxu0 %v320
        %475 = vmatpush.msra.mxu0 %v319
        %476 = vmatmul.f32.gmra.mxu0 %v315
        %v477 = vpop.f32.mrf.mxu0
        %v478 = vadd.f32 %v455, %v477
        %479 = vmatmul.f32.gmra.mxu0 %v317
        %v480 = vpop.f32.mrf.mxu0
        %v481 = vadd.f32 %v458, %v480
        %482 = vdwg.mxu0
        %483 = vmatpush.msra.mxu0 %v350
        %484 = vmatpush.msra.mxu0 %v349
        %485 = vmatpush.msra.mxu0 %v348
        %486 = vmatpush.msra.mxu0 %v347
        %487 = vmatpush.msra.mxu0 %v346
        %488 = vmatpush.msra.mxu0 %v345
        %489 = vmatpush.msra.mxu0 %v344
        %490 = vmatpush.msra.mxu0 %v343
        %491 = vmatpush.msra.mxu0 %v342
        %492 = vmatpush.msra.mxu0 %v341
        %493 = vmatpush.msra.mxu0 %v340
        %494 = vmatpush.msra.mxu0 %v339
        %495 = vmatpush.msra.mxu0 %v338
        %496 = vmatpush.msra.mxu0 %v337
        %497 = vmatpush.msra.mxu0 %v336
        %498 = vmatpush.msra.mxu0 %v335
        %499 = vmatmul.f32.gmra.mxu0 %v316
        %v500 = vpop.f32.mrf.mxu0
        %v501 = vadd.f32 %v478, %v500
        %502 = vmatmul.f32.gmra.mxu0 %v318
        %v503 = vpop.f32.mrf.mxu0
        %v504 = vadd.f32 %v481, %v503
        %505 = vdwg.mxu0
        %v506 = vld [vmem:[%s309] sm:$0x1]
        %v508 = vperm.slane %v506, 0
        %v510 = vadd.f32 %v501, %v508
        %v511 = vadd.f32 %v504, %v508
        %512 = vst [vmem:[%s299] sm:$0xff] %v510
        %513 = vst [vmem:[%s299 + $0x8] sm:$0xff] %v511
        %s514 = sand.u32 %s169, 1
        %s515 = scalar_lea.sflag [#allocation4], %s514
        %s516 = sand.u32 %s169, 1
        %s517 = smul.addr %s516, 16
        %s518 = scalar_lea.vmem [#allocation5], %s517
        // Predicated region
        $region45: #{tpu_custom_call.1} parent=39 // pred_check
          %p519 = pneg %p179
        $region46: #{tpu_custom_call.1} parent=39 // pred_check_branch
          %521 = sbr.rel (%p519) target = $region48
        $region47: #{tpu_custom_call.1} parent=39 // pred_region
          %s522 = smul.u32 2, %s27
          %524 = vsyncadd %s515, 0
          %s525 = smul.addr %s522, 2
          %s526 = sadd.s32 %s26, %s525
          %s527 = smul.addr %s526, 8
          %s528 = scalar_lea.hbm %s5, %s527
          %s529 = sshll.u32 %s518, 4
          %s530 = int_to_ptr.vmem [resolvable:$true] %s529
          %s531 = sshll.u32 %s528, 4
          %s532 = int_to_ptr.hbm [resolvable:$true] %s531
          %537 = dma.vmem_to_hbm [thread:$0]  %s530, 256, %s532, %s515, 128, 256, 8
        $region48: #{tpu_custom_call.1} parent=39 // pred_fallthru
          _
      $region40: #{tpu_custom_call.1} parent=5 // pred_fallthru
        _
      %p538 = scmp.le.s32.totalorder 2, %s17
      // Predicated region
      $region49: #{tpu_custom_call.1} parent=5 // pred_check
        %p539 = pneg %p538
      $region50: #{tpu_custom_call.1} parent=5 // pred_check_branch
        %541 = sbr.rel (%p539) target = $region52
      $region51: #{tpu_custom_call.1} parent=5 // pred_region
        %s542 = ssub.s32 %s17, 2
        // Predicated region
        $region53: #{tpu_custom_call.1} parent=51 // pred_check
          %p543 = pneg %p185
        $region54: #{tpu_custom_call.1} parent=51 // pred_check_branch
          %545 = sbr.rel (%p543) target = $region56
        $region55: #{tpu_custom_call.1} parent=51 // pred_region
          %s546 = sand.u32 %s170, 1
          %s547 = scalar_lea.sflag [#allocation4], %s546
          %s548 = sand.u32 %s170, 1
          %s549 = smul.addr %s548, 16
          %s550 = scalar_lea.vmem [#allocation5], %s549
          %552 = dma.done %s547, 256
        $region56: #{tpu_custom_call.1} parent=51 // pred_fallthru
          _
      $region52: #{tpu_custom_call.1} parent=5 // pred_fallthru
        _
    $region6: #{tpu_custom_call.1} parent=1 // loop_footer
      %s21 = sadd.s32 1, %s17
    $region7: #{tpu_custom_call.1} parent=1 // loop_footer_branch
      %16 = sbr.rel target = $region3
    $region8: #{tpu_custom_call.1} parent=1 // loop_exit
      _
    %553 = vsyncpa [#allocation3], 1
    %s554 = scalar_lea.sflag [#allocation3], 1
    %555 = vsyncpa %s554, 1
    %556 = vsyncpa [#allocation4], 1
    %s557 = scalar_lea.sflag [#allocation4], 1
    %558 = vsyncpa %s557, 1

</llo_original>
